<compile_context>
chip_gen: v7x
topology: tpu7x:2x2x1
jax: 0.10.0
libtpu: 0.0.40
codegen_flags: <defaults>
</compile_context>

<pallas_src>
import functools

import jax
import jax.numpy as jnp
from jax.experimental import pallas as pl
from jax.experimental.pallas import tpu as pltpu


# Above this many rows the copy is split into 2 DMA streams so both v7x
# TensorCores can issue DMAs concurrently.  Below it a single whole-array DMA
# has the least overhead (v5e/v6e have a single TC, so splitting never helps
# there anyway).
_SPLIT_ROWS_THRESHOLD = 1024


def _dma_copy_kernel(x_ref, o_ref, sem, *, chunk_rows: int):
    """HBM->HBM DMA of this program's row chunk (no VMEM staging)."""
    i = pl.program_id(0)
    start = pl.multiple_of(i * chunk_rows, chunk_rows)
    cp = pltpu.make_async_copy(
        x_ref.at[pl.ds(start, chunk_rows), :],
        o_ref.at[pl.ds(start, chunk_rows), :],
        sem,
    )
    cp.start()
    cp.wait()


def _identity_copy_pallas(x: jax.Array, donate: bool) -> jax.Array:
    """Identity as a single (or 2-way split) HBM->HBM DMA."""
    orig_shape = x.shape
    if x.ndim >= 2:
        lane = orig_shape[-1]
        rows = x.size // lane
    else:
        lane = max(1, x.size)
        rows = 1
    x2 = x.reshape(rows, lane)

    # 2 parallel DMA streams only when the slab is big enough to matter and
    # splits evenly; otherwise one whole-array DMA.
    num_chunks = 2 if (rows >= _SPLIT_ROWS_THRESHOLD and rows % 2 == 0) else 1
    chunk_rows = rows // num_chunks

    itemsize = jnp.dtype(x.dtype).itemsize
    kernel = functools.partial(_dma_copy_kernel, chunk_rows=chunk_rows)

    out2 = pl.pallas_call(
        kernel,
        out_shape=jax.ShapeDtypeStruct((rows, lane), x.dtype),
        grid_spec=pltpu.PrefetchScalarGridSpec(
            num_scalar_prefetch=0,
            grid=(num_chunks,),
            in_specs=[pl.BlockSpec(memory_space=pl.ANY)],
            out_specs=pl.BlockSpec(memory_space=pl.ANY),
            scratch_shapes=[pltpu.SemaphoreType.DMA(())],
        ),
        # Only alias when the caller genuinely donates x; unconditional
        # aliasing of a live input adds a defensive copy (extra HBM pass).
        input_output_aliases=({0: 0} if donate else {}),
        cost_estimate=pl.CostEstimate(
            flops=0,
            transcendentals=0,
            bytes_accessed=2 * x.size * itemsize,
        ),
        compiler_params=pltpu.CompilerParams(
            dimension_semantics=("parallel",),
            has_side_effects=True,
        ),
    )(x2)
    return out2.reshape(orig_shape)


def can_be_used_as_mlp_forward(
    x: jax.Array, *, use_pallas: bool = False, donate: bool = False
) -> jax.Array:
    """CanBeUsedAsMLP.forward (identity on [batch, pos, d_model]).

    Default path returns x with zero HBM traffic.  Set use_pallas=True to
    force an explicit on-device copy via a single HBM->HBM DMA kernel.
    """
    if not use_pallas or x.size == 0:
        return x
    return _identity_copy_pallas(x, donate=donate)


class CanBeUsedAsMLP:
    """Minimal JAX-side mirror of the PyTorch base class."""

    def __init__(self, cfg: dict):
        if cfg.get("d_mlp") is None:
            raise ValueError("d_mlp must be set to use an MLP")
        self.cfg = cfg
        self.d_mlp = cfg["d_mlp"]
        # TODO(synk): select_activation_function / hook_mid / ln belong to
        # subclasses and are not exercised by this base-class forward.

    def forward(self, x: jax.Array, *, use_pallas: bool = False) -> jax.Array:
        """The format for all forward functions for any MLP (identity)."""
        return can_be_used_as_mlp_forward(x, use_pallas=use_pallas)


if __name__ == "__main__":
    key = jax.random.PRNGKey(0)

    # Primary case: batch=2, pos=8, d_model=32.
    batch, pos, d_model = 2, 8, 32
    x = jax.random.normal(key, (batch, pos, d_model), dtype=jnp.float32)
    mlp = CanBeUsedAsMLP({"d_mlp": 64, "d_model": d_model})

    # 1) Default fast path: identity returns x with zero HBM traffic.
    out_fast = jax.block_until_ready(mlp.forward(x))
    assert out_fast.shape == x.shape and out_fast.dtype == x.dtype
    assert jnp.array_equal(out_fast, x), "identity mismatch (fast path)"

    # 2) Explicit Pallas HBM->HBM DMA path (single DMA, small slab).
    out_pallas = jax.block_until_ready(mlp.forward(x, use_pallas=True))
    assert out_pallas.shape == x.shape and out_pallas.dtype == x.dtype
    assert jnp.array_equal(out_pallas, x), "identity mismatch (pallas path)"

    # 3) d_model not a multiple of 128, bf16 -> DMA path is layout-agnostic.
    x2 = jax.random.normal(jax.random.PRNGKey(1), (2, 8, 33), dtype=jnp.bfloat16)
    out2 = jax.block_until_ready(can_be_used_as_mlp_forward(x2, use_pallas=True))
    assert out2.shape == x2.shape and out2.dtype == x2.dtype
    assert jnp.array_equal(out2, x2), "identity mismatch (odd-lane case)"

    # 4) Larger slab exercising the 2-way split DMA path (rows = 2048).
    x3 = jax.random.normal(jax.random.PRNGKey(2), (16, 128, 128), dtype=jnp.float32)
    out3 = jax.block_until_ready(can_be_used_as_mlp_forward(x3, use_pallas=True))
    assert out3.shape == x3.shape and out3.dtype == x3.dtype
    assert jnp.array_equal(out3, x3), "identity mismatch (split-DMA case)"

    print("KERNEL_OK")
</pallas_src>

<mosaic_0001>
module attributes {stable_mosaic.version = 11 : i64} {
  func.func @_dma_copy_kernel(%arg0: i32, %arg1: memref<16x32xf32, #tpu.memory_space<any>>, %arg2: memref<16x32xf32, #tpu.memory_space<any>>, %arg3: memref<!tpu.dma_semaphore, #tpu.memory_space<semaphore_mem>>) attributes {dimension_semantics = [#tpu.dimension_semantics<parallel>], iteration_bounds = array<i64: 1>, scalar_prefetch = 0 : i64, scratch_operands = 1 : i64, tpu.core_type = #tpu.core_type<tc>, window_params = [{}, {}]} {
    %c16_i32 = arith.constant 16 : i32
    %0 = arith.muli %arg0, %c16_i32 : i32
    %1 = tpu.assume_multiple %0, 16 : i32
    %c0_i32 = arith.constant 0 : i32
    %2 = tpu.memref_slice %arg1[%1, %c0_i32] : memref<16x32xf32, #tpu.memory_space<any>> -> memref<16x32xf32, #tpu.memory_space<any>>
    %c0_i32_0 = arith.constant 0 : i32
    %3 = tpu.memref_slice %arg2[%1, %c0_i32_0] : memref<16x32xf32, #tpu.memory_space<any>> -> memref<16x32xf32, #tpu.memory_space<any>>
    tpu.enqueue_dma source(%2 : memref<16x32xf32, #tpu.memory_space<any>>) target(%3 : memref<16x32xf32, #tpu.memory_space<any>>) target_semaphore(%arg3 : memref<!tpu.dma_semaphore, #tpu.memory_space<semaphore_mem>>)
    %c0_i32_1 = arith.constant 0 : i32
    %4 = tpu.memref_slice %arg1[%1, %c0_i32_1] : memref<16x32xf32, #tpu.memory_space<any>> -> memref<16x32xf32, #tpu.memory_space<any>>
    %c0_i32_2 = arith.constant 0 : i32
    %5 = tpu.memref_slice %arg2[%1, %c0_i32_2] : memref<16x32xf32, #tpu.memory_space<any>> -> memref<16x32xf32, #tpu.memory_space<any>>
    tpu.wait_dma2 semaphore(%arg3 : memref<!tpu.dma_semaphore, #tpu.memory_space<semaphore_mem>>) src(%4 : memref<16x32xf32, #tpu.memory_space<any>>) dst(%5 : memref<16x32xf32, #tpu.memory_space<any>>)
    return
  }
}

</mosaic_0001>

<llo_original>
// kernel: tpu_custom_call.1
$region0: #{tpu_custom_call.1}
  #allocation0 [shape = 'u32[]', space=smem, size = 0x4, offset = 0x4, fixed_abs, tag = 'smem constant byte address 0x4 - core index']
  #allocation1 [shape = 'u32[144,128]{1,0:T(1,128)}', space=vmem, size = 0x12000, scoped, tag = 'internal scratch']
  #allocation2 [shape = 's32[1]{0}', space=sflag, size = 0x4, scoped, tag = 'scratch operand']
  #allocation3 [shape = 's32[]', space=sflag, size = 0x4, offset = 0, fixed_abs, tag = 'sflag constant byte address 0x0 - dummy sync flag']
  #allocation4 [shape = 'u32[0]{0}', space=smem, size = 0, offset = 0, fixed_abs, tag = 'smem constant byte address 0x0 - null']
  %s0 = inlined_call_operand.hbm [shape: f32[16,32], index: 0, kind: input, shape index: {}]
  %s1 = inlined_call_operand.hbm [shape: f32[16,32], index: 1, kind: output, shape index: {}]
  %s2 = sld [smem:[#allocation0]]
  $region2: #{tpu_custom_call.1} parent=0
    _
  %s4 = ssub.s32 1, %s2
  %s5 = scalar_select 0, %s4, %s2
  %s6 = smul.u32 0, 16
  %s7 = smul.addr %s6, 16
  %s8 = scalar_lea.hbm %s0, %s7
  %s9 = smul.addr %s6, 16
  %s10 = scalar_lea.hbm %s1, %s9
  %s12 = sshll.u32 1, 14
  %s13 = sxor.u32 4294967295, %s12
  %s16 = sshll.u32 3, 24
  %s17 = sxor.u32 4294967295, %s16
  %s18 = sand.u32 0, %s17
  %s20 = sor.u32 %s18, 0
  %23 = dma.general %s8, 256, %s10, [#allocation2], [#allocation3], [#allocation4], %s20, 0
  %s24 = smul.u32 16, 1
  %s25 = sshll.u32 %s24, 4
  %26 = dma.done [#allocation2], %s25
  %27 = vsyncmov [#allocation2]
  %s28 = vpop.sfrf %27
  %p29 = scmp.eq.s32.totalorder %s28, 0
  %p30 = pneg %p29
  %32 = shalt.err (%p30)

</llo_original>
